<compile_context>
chip_gen: v5e
topology: v5e:2x2
jax: 0.10.0
libtpu: 0.0.40
codegen_flags: <defaults>
</compile_context>

<pallas_src>
import jax
import jax.numpy as jnp
from jax.experimental import pallas as pl
from jax.experimental.pallas import tpu as pltpu


def pos_embedding_kernel(x_ref, w_ref, pos_ref, out_ref):
    # x_ref:   (K, B, TN)  patches: K on the slab axis, B on sublanes, N-tile on lanes
    # w_ref:   (K, B, 1)   flattened conv weight, lane-broadcast per slab
    # pos_ref: (1, TN)     positional encoding + bias, sublane-broadcast over batch
    # out_ref: (B, TN)     output lands in its final (B, N) layout
    x = x_ref[...]                                  # (K, B, TN)
    w = w_ref[...]                                  # (K, B, 1) -> broadcasts over lanes
    s = jnp.sum(x * w, axis=0)                      # (B, TN): leading-axis reduce = VALU adds
    out_ref[...] = s + pos_ref[...]                 # (1, TN) broadcasts over B sublanes


def _choose_tile_n(N, K, B):
    """Pick a lane-tile TN (full N, or a multiple of 128) and the grid size over N.

    Budget ~8 MiB per x input buffer (double-buffered -> ~16 MiB), which is safe for
    v7x's 32 MiB scoped / 64 MiB physical VMEM and v5e's 16 MiB scoped default.
    """
    sublanes = ((max(B, 1) + 7) // 8) * 8
    bytes_per_128_lane_col = K * sublanes * 4 * 128     # one 128-lane column of the x block (f32)
    budget = 8 << 20
    max_cols = max(1, budget // max(bytes_per_128_lane_col, 1))
    cols_needed = (N + 127) // 128
    cols = min(cols_needed, max_cols)
    tn = cols * 128
    if tn >= N:
        return N, 1                                     # single full-N block (handles N % 128 != 0)
    return tn, pl.cdiv(N, tn)


def _pos_embedding_forward(x_nchw, conv_weight, conv_bias, pos_encoding, *, patch_size):
    """x_nchw: (B, 3, H, W); conv_weight: (1, 3, ps, ps); conv_bias: (1,);
    pos_encoding: (1, (H//ps)*(W//ps)). Returns (B, (H//ps)*(W//ps))."""
    B, C, H, W = x_nchw.shape
    ps = patch_size
    assert H % ps == 0 and W % ps == 0, "H and W must be divisible by patch_size"
    n_h, n_w = H // ps, W // ps
    N = n_h * n_w
    K = C * ps * ps

    # One relayout (fused by XLA under jit) directly into the (K, B, N) kernel layout.
    #   slab index k = c*ps*ps + ph*ps + pw   (matches OIHW weight flatten order)
    #   lane  index n = hp*n_w + wp           (matches conv-output 'b (c h w)' flatten)
    # TODO(synk): for large inputs, replace this XLA relayout with in-kernel patch
    # gathering (memory_space=pl.ANY + manual DMA over the NCHW layout) to remove
    # the extra HBM pass entirely.
    x_p = x_nchw.reshape(B, C, n_h, ps, n_w, ps)
    x_p = jnp.transpose(x_p, (1, 3, 5, 0, 2, 4))        # (C, ps, ps, B, n_h, n_w)
    x_p = x_p.reshape(K, B, N).astype(jnp.float32)

    # Tiny weight array, pre-broadcast over batch so the kernel only lane-broadcasts.
    w_kb1 = jnp.broadcast_to(conv_weight.reshape(K, 1, 1).astype(jnp.float32), (K, B, 1))

    # Fold the conv bias into the positional encoding once on the host; the batch
    # broadcast happens inside the kernel (sublane broadcast), so no host jnp.tile.
    pos_b = pos_encoding.astype(jnp.float32).reshape(1, N) + conv_bias.astype(jnp.float32)[0]

    tn, grid_n = _choose_tile_n(N, K, B)

    cost = pl.CostEstimate(
        flops=2 * K * B * N,
        transcendentals=0,
        bytes_accessed=4 * (K * B * N + K * B + N + B * N),
    )

    out = pl.pallas_call(
        pos_embedding_kernel,
        out_shape=jax.ShapeDtypeStruct((B, N), jnp.float32),
        grid=(grid_n,),
        in_specs=[
            pl.BlockSpec((K, B, tn), lambda j: (0, 0, j)),   # patches, tiled over lanes
            pl.BlockSpec((K, B, 1), lambda j: (0, 0, 0)),    # weight, same block every step
            pl.BlockSpec((1, tn), lambda j: (0, j)),         # pos + bias, tiled over lanes
        ],
        out_specs=pl.BlockSpec((B, tn), lambda j: (0, j)),
        compiler_params=pltpu.CompilerParams(
            dimension_semantics=("parallel",),               # lane-tile axis: megacore-splittable
        ),
        cost_estimate=cost,
    )(x_p, w_kb1, pos_b)

    return out


# jit so the relayout (reshape + transpose + cast) fuses into a single XLA pass
# feeding the pallas_call.
pos_embedding_forward = jax.jit(_pos_embedding_forward, static_argnames=("patch_size",))


def pos_embedding_reference(x_nchw, conv_weight, conv_bias, pos_encoding, patch_size):
    """Pure-JAX reference replicating the PyTorch forward."""
    embeds = jax.lax.conv_general_dilated(
        x_nchw.astype(jnp.float32),
        conv_weight.astype(jnp.float32),
        window_strides=(patch_size, patch_size),
        padding="VALID",
        dimension_numbers=("NCHW", "OIHW", "NCHW"),
    ) + conv_bias.reshape(1, -1, 1, 1)
    B = x_nchw.shape[0]
    flattened = embeds.reshape(B, -1)
    return flattened + pos_encoding


if __name__ == "__main__":
    # Small, deterministic config: patch_size=4, num_of_patches=8 -> H=W=32, N=64, K=48.
    patch_size = 4
    num_of_patches = 8
    B = 2
    H = W = patch_size * num_of_patches
    N = num_of_patches * num_of_patches

    key = jax.random.PRNGKey(0)
    k_x, k_w, k_b, k_pos = jax.random.split(key, 4)

    x = jax.random.normal(k_x, (B, 3, H, W), dtype=jnp.float32)
    conv_weight = jax.random.normal(k_w, (1, 3, patch_size, patch_size), dtype=jnp.float32) * 0.1
    conv_bias = jax.random.normal(k_b, (1,), dtype=jnp.float32) * 0.1
    pos_encoding = jax.random.normal(k_pos, (1, N), dtype=jnp.float32)

    out = pos_embedding_forward(x, conv_weight, conv_bias, pos_encoding, patch_size=patch_size)
    out = jax.block_until_ready(out)

    ref = pos_embedding_reference(x, conv_weight, conv_bias, pos_encoding, patch_size)
    ref = jax.block_until_ready(ref)

    assert out.shape == (B, N), f"bad shape {out.shape}"
    assert jnp.allclose(out, ref, atol=1e-4, rtol=1e-4), "mismatch vs reference"

    print("KERNEL_OK")
</pallas_src>

<mosaic_0001>
module attributes {stable_mosaic.version = 11 : i64} {
  func.func @pos_embedding_kernel(%arg0: i32, %arg1: memref<48x2x64xf32, #tpu.memory_space<vmem>>, %arg2: memref<48x2x1xf32, #tpu.memory_space<vmem>>, %arg3: memref<1x64xf32, #tpu.memory_space<vmem>>, %arg4: memref<2x64xf32, #tpu.memory_space<vmem>>) attributes {dimension_semantics = [#tpu.dimension_semantics<parallel>], iteration_bounds = array<i64: 1>, scalar_prefetch = 0 : i64, scratch_operands = 0 : i64, tpu.core_type = #tpu.core_type<tc>, window_params = [{transform_indices = @transform_0, window_bounds = array<i64: 48, 2, 64>}, {pipeline_mode = #tpu.pipeline_mode<synchronous>, transform_indices = @transform_1, window_bounds = array<i64: 48, 2, 1>}, {transform_indices = @transform_2, window_bounds = array<i64: 1, 64>}, {transform_indices = @transform_3, window_bounds = array<i64: 2, 64>}]} {
    %c0 = arith.constant 0 : index
    %c0_0 = arith.constant 0 : index
    %c0_1 = arith.constant 0 : index
    %0 = vector.load %arg1[%c0, %c0_0, %c0_1] : memref<48x2x64xf32, #tpu.memory_space<vmem>>, vector<48x2x64xf32>
    %c0_2 = arith.constant 0 : index
    %c0_3 = arith.constant 0 : index
    %c0_4 = arith.constant 0 : index
    %1 = vector.load %arg2[%c0_2, %c0_3, %c0_4] : memref<48x2x1xf32, #tpu.memory_space<vmem>>, vector<48x2x1xf32>
    %2 = vector.broadcast %1 : vector<48x2x1xf32> to vector<48x2x64xf32>
    %3 = arith.mulf %0, %2 : vector<48x2x64xf32>
    %cst = arith.constant dense<0.000000e+00> : vector<2x64xf32>
    %4 = vector.multi_reduction <add>, %3, %cst [0] : vector<48x2x64xf32> to vector<2x64xf32>
    %c0_5 = arith.constant 0 : index
    %c0_6 = arith.constant 0 : index
    %5 = vector.load %arg3[%c0_5, %c0_6] : memref<1x64xf32, #tpu.memory_space<vmem>>, vector<1x64xf32>
    %6 = vector.broadcast %5 : vector<1x64xf32> to vector<2x64xf32>
    %7 = arith.addf %4, %6 : vector<2x64xf32>
    %c0_7 = arith.constant 0 : index
    %c0_8 = arith.constant 0 : index
    %8 = vector.load %arg4[%c0_7, %c0_8] : memref<2x64xf32, #tpu.memory_space<vmem>>, vector<2x64xf32>
    tpu.vector_store %arg4[%c0_7, %c0_8], %7 {strides = array<i32>} : memref<2x64xf32, #tpu.memory_space<vmem>>, vector<2x64xf32>,
    return
  }
  func.func @transform_0(%arg0: i32) -> (i32, i32, i32) {
    %c0_i32 = arith.constant 0 : i32
    %c0_i32_0 = arith.constant 0 : i32
    %c0_i32_1 = arith.constant 0 : i32
    return %c0_i32, %c0_i32_0, %arg0 : i32, i32, i32
  }
  func.func @transform_1(%arg0: i32) -> (i32, i32, i32) {
    %c0_i32 = arith.constant 0 : i32
    %c0_i32_0 = arith.constant 0 : i32
    %c0_i32_1 = arith.constant 0 : i32
    %c0_i32_2 = arith.constant 0 : i32
    return %c0_i32, %c0_i32_0, %c0_i32_1 : i32, i32, i32
  }
  func.func @transform_2(%arg0: i32) -> (i32, i32) {
    %c0_i32 = arith.constant 0 : i32
    %c0_i32_0 = arith.constant 0 : i32
    return %c0_i32, %arg0 : i32, i32
  }
  func.func @transform_3(%arg0: i32) -> (i32, i32) {
    %c0_i32 = arith.constant 0 : i32
    %c0_i32_0 = arith.constant 0 : i32
    return %c0_i32, %arg0 : i32, i32
  }
}

</mosaic_0001>

<llo_original>
// kernel: _pos_embedding_forward.1
$region0: #{_pos_embedding_forward.1}
  #allocation0 [shape = 'u32[]', space=smem, size = 0x4, offset = 0x4, fixed_abs, tag = 'smem constant byte address 0x4 - core index']
  #allocation1 [shape = 'u32[72,128]{1,0:T(1,128)}', space=vmem, size = 0x9000, scoped, tag = 'internal scratch']
  %s0 = inlined_call_operand.vmem [shape: f32[48,2,64], index: 0, kind: input, shape index: {}]
  %s1 = inlined_call_operand.vmem [shape: f32[48,2,1], index: 1, kind: input, shape index: {}]
  %s2 = inlined_call_operand.vmem [shape: f32[1,64], index: 2, kind: input, shape index: {}]
  %s3 = inlined_call_operand.hbm [shape: f32[2,64], index: 3, kind: output, shape index: {}]
  %s4 = sld [smem:[#allocation0]]
  $region22: #{_pos_embedding_forward.1} parent=0
    _
  %s6 = ssub.s32 1, %s4
  %s7 = scalar_select 0, %s6, %s4
  $region1: #{_pos_embedding_forward.1} parent=0
    #allocation2 [shape = 'u8[1024]{0}', space=vmem, size = 0x400, scoped, tag = 'output window, operand 0, single buffered']
    #allocation3 [shape = 's32[1]{0}', space=sflag, size = 0x4, scoped, tag = 'scoped memory for _pos_embedding_forward.1']
    %8 = vsyncpa [#allocation3], 0
    // Predicated region
    $region2: #{_pos_embedding_forward.1} parent=1 // pred_check
      _
    $region3: #{_pos_embedding_forward.1} parent=1 // pred_check_branch
      %10 = sbr.rel (0) target = $region5
    $region4: #{_pos_embedding_forward.1} parent=1 // pred_region
      _
    $region5: #{_pos_embedding_forward.1} parent=1 // pred_fallthru
      _
    // Predicated region
    $region6: #{_pos_embedding_forward.1} parent=1 // pred_check
      _
    $region7: #{_pos_embedding_forward.1} parent=1 // pred_check_branch
      %12 = sbr.rel (0) target = $region9
    $region8: #{_pos_embedding_forward.1} parent=1 // pred_region
      _
    $region9: #{_pos_embedding_forward.1} parent=1 // pred_fallthru
      _
    // Predicated region
    $region10: #{_pos_embedding_forward.1} parent=1 // pred_check
      _
    $region11: #{_pos_embedding_forward.1} parent=1 // pred_check_branch
      %14 = sbr.rel (0) target = $region13
    $region12: #{_pos_embedding_forward.1} parent=1 // pred_region
      _
    $region13: #{_pos_embedding_forward.1} parent=1 // pred_fallthru
      _
    %v15 = vld [vmem:[%s0] sm:$0x3]
    %v16 = vld [vmem:[%s0 + $0x2] sm:$0x3]
    %v17 = vld [vmem:[%s0 + $0x4] sm:$0x3]
    %v18 = vld [vmem:[%s0 + $0x6] sm:$0x3]
    %v19 = vld [vmem:[%s0 + $0x8] sm:$0x3]
    %v20 = vld [vmem:[%s0 + $0xa] sm:$0x3]
    %v21 = vld [vmem:[%s0 + $0xc] sm:$0x3]
    %v22 = vld [vmem:[%s0 + $0xe] sm:$0x3]
    %v23 = vld [vmem:[%s0 + $0x10] sm:$0x3]
    %v24 = vld [vmem:[%s0 + $0x12] sm:$0x3]
    %v25 = vld [vmem:[%s0 + $0x14] sm:$0x3]
    %v26 = vld [vmem:[%s0 + $0x16] sm:$0x3]
    %v27 = vld [vmem:[%s0 + $0x18] sm:$0x3]
    %v28 = vld [vmem:[%s0 + $0x1a] sm:$0x3]
    %v29 = vld [vmem:[%s0 + $0x1c] sm:$0x3]
    %v30 = vld [vmem:[%s0 + $0x1e] sm:$0x3]
    %v31 = vld [vmem:[%s0 + $0x20] sm:$0x3]
    %v32 = vld [vmem:[%s0 + $0x22] sm:$0x3]
    %v33 = vld [vmem:[%s0 + $0x24] sm:$0x3]
    %v34 = vld [vmem:[%s0 + $0x26] sm:$0x3]
    %v35 = vld [vmem:[%s0 + $0x28] sm:$0x3]
    %v36 = vld [vmem:[%s0 + $0x2a] sm:$0x3]
    %v37 = vld [vmem:[%s0 + $0x2c] sm:$0x3]
    %v38 = vld [vmem:[%s0 + $0x2e] sm:$0x3]
    %v39 = vld [vmem:[%s0 + $0x30] sm:$0x3]
    %v40 = vld [vmem:[%s0 + $0x32] sm:$0x3]
    %v41 = vld [vmem:[%s0 + $0x34] sm:$0x3]
    %v42 = vld [vmem:[%s0 + $0x36] sm:$0x3]
    %v43 = vld [vmem:[%s0 + $0x38] sm:$0x3]
    %v44 = vld [vmem:[%s0 + $0x3a] sm:$0x3]
    %v45 = vld [vmem:[%s0 + $0x3c] sm:$0x3]
    %v46 = vld [vmem:[%s0 + $0x3e] sm:$0x3]
    %v47 = vld [vmem:[%s0 + $0x40] sm:$0x3]
    %v48 = vld [vmem:[%s0 + $0x42] sm:$0x3]
    %v49 = vld [vmem:[%s0 + $0x44] sm:$0x3]
    %v50 = vld [vmem:[%s0 + $0x46] sm:$0x3]
    %v51 = vld [vmem:[%s0 + $0x48] sm:$0x3]
    %v52 = vld [vmem:[%s0 + $0x4a] sm:$0x3]
    %v53 = vld [vmem:[%s0 + $0x4c] sm:$0x3]
    %v54 = vld [vmem:[%s0 + $0x4e] sm:$0x3]
    %v55 = vld [vmem:[%s0 + $0x50] sm:$0x3]
    %v56 = vld [vmem:[%s0 + $0x52] sm:$0x3]
    %v57 = vld [vmem:[%s0 + $0x54] sm:$0x3]
    %v58 = vld [vmem:[%s0 + $0x56] sm:$0x3]
    %v59 = vld [vmem:[%s0 + $0x58] sm:$0x3]
    %v60 = vld [vmem:[%s0 + $0x5a] sm:$0x3]
    %v61 = vld [vmem:[%s0 + $0x5c] sm:$0x3]
    %v62 = vld [vmem:[%s0 + $0x5e] sm:$0x3]
    %v63 = vld [vmem:[%s1] sm:$0x3]
    %v64 = vld [vmem:[%s1 + $0x2] sm:$0x3]
    %v65 = vld [vmem:[%s1 + $0x4] sm:$0x3]
    %v66 = vld [vmem:[%s1 + $0x6] sm:$0x3]
    %v67 = vld [vmem:[%s1 + $0x8] sm:$0x3]
    %v68 = vld [vmem:[%s1 + $0xa] sm:$0x3]
    %v69 = vld [vmem:[%s1 + $0xc] sm:$0x3]
    %v70 = vld [vmem:[%s1 + $0xe] sm:$0x3]
    %v71 = vld [vmem:[%s1 + $0x10] sm:$0x3]
    %v72 = vld [vmem:[%s1 + $0x12] sm:$0x3]
    %v73 = vld [vmem:[%s1 + $0x14] sm:$0x3]
    %v74 = vld [vmem:[%s1 + $0x16] sm:$0x3]
    %v75 = vld [vmem:[%s1 + $0x18] sm:$0x3]
    %v76 = vld [vmem:[%s1 + $0x1a] sm:$0x3]
    %v77 = vld [vmem:[%s1 + $0x1c] sm:$0x3]
    %v78 = vld [vmem:[%s1 + $0x1e] sm:$0x3]
    %v79 = vld [vmem:[%s1 + $0x20] sm:$0x3]
    %v80 = vld [vmem:[%s1 + $0x22] sm:$0x3]
    %v81 = vld [vmem:[%s1 + $0x24] sm:$0x3]
    %v82 = vld [vmem:[%s1 + $0x26] sm:$0x3]
    %v83 = vld [vmem:[%s1 + $0x28] sm:$0x3]
    %v84 = vld [vmem:[%s1 + $0x2a] sm:$0x3]
    %v85 = vld [vmem:[%s1 + $0x2c] sm:$0x3]
    %v86 = vld [vmem:[%s1 + $0x2e] sm:$0x3]
    %v87 = vld [vmem:[%s1 + $0x30] sm:$0x3]
    %v88 = vld [vmem:[%s1 + $0x32] sm:$0x3]
    %v89 = vld [vmem:[%s1 + $0x34] sm:$0x3]
    %v90 = vld [vmem:[%s1 + $0x36] sm:$0x3]
    %v91 = vld [vmem:[%s1 + $0x38] sm:$0x3]
    %v92 = vld [vmem:[%s1 + $0x3a] sm:$0x3]
    %v93 = vld [vmem:[%s1 + $0x3c] sm:$0x3]
    %v94 = vld [vmem:[%s1 + $0x3e] sm:$0x3]
    %v95 = vld [vmem:[%s1 + $0x40] sm:$0x3]
    %v96 = vld [vmem:[%s1 + $0x42] sm:$0x3]
    %v97 = vld [vmem:[%s1 + $0x44] sm:$0x3]
    %v98 = vld [vmem:[%s1 + $0x46] sm:$0x3]
    %v99 = vld [vmem:[%s1 + $0x48] sm:$0x3]
    %v100 = vld [vmem:[%s1 + $0x4a] sm:$0x3]
    %v101 = vld [vmem:[%s1 + $0x4c] sm:$0x3]
    %v102 = vld [vmem:[%s1 + $0x4e] sm:$0x3]
    %v103 = vld [vmem:[%s1 + $0x50] sm:$0x3]
    %v104 = vld [vmem:[%s1 + $0x52] sm:$0x3]
    %v105 = vld [vmem:[%s1 + $0x54] sm:$0x3]
    %v106 = vld [vmem:[%s1 + $0x56] sm:$0x3]
    %v107 = vld [vmem:[%s1 + $0x58] sm:$0x3]
    %v108 = vld [vmem:[%s1 + $0x5a] sm:$0x3]
    %v109 = vld [vmem:[%s1 + $0x5c] sm:$0x3]
    %v110 = vld [vmem:[%s1 + $0x5e] sm:$0x3]
    %112 = vset.pattern.permute.xlu0 0
    %113 = vperm.xlu0 %112, %v63
    %v114 = vpop.permute.xlu0 %113
    %117 = vset.pattern.permute.xlu0 0
    %118 = vperm.xlu0 %117, %v64
    %v119 = vpop.permute.xlu0 %118
    %122 = vset.pattern.permute.xlu0 0
    %123 = vperm.xlu0 %122, %v65
    %v124 = vpop.permute.xlu0 %123
    %127 = vset.pattern.permute.xlu0 0
    %128 = vperm.xlu0 %127, %v66
    %v129 = vpop.permute.xlu0 %128
    %132 = vset.pattern.permute.xlu0 0
    %133 = vperm.xlu0 %132, %v67
    %v134 = vpop.permute.xlu0 %133
    %137 = vset.pattern.permute.xlu0 0
    %138 = vperm.xlu0 %137, %v68
    %v139 = vpop.permute.xlu0 %138
    %142 = vset.pattern.permute.xlu0 0
    %143 = vperm.xlu0 %142, %v69
    %v144 = vpop.permute.xlu0 %143
    %147 = vset.pattern.permute.xlu0 0
    %148 = vperm.xlu0 %147, %v70
    %v149 = vpop.permute.xlu0 %148
    %152 = vset.pattern.permute.xlu0 0
    %153 = vperm.xlu0 %152, %v71
    %v154 = vpop.permute.xlu0 %153
    %157 = vset.pattern.permute.xlu0 0
    %158 = vperm.xlu0 %157, %v72
    %v159 = vpop.permute.xlu0 %158
    %162 = vset.pattern.permute.xlu0 0
    %163 = vperm.xlu0 %162, %v73
    %v164 = vpop.permute.xlu0 %163
    %167 = vset.pattern.permute.xlu0 0
    %168 = vperm.xlu0 %167, %v74
    %v169 = vpop.permute.xlu0 %168
    %172 = vset.pattern.permute.xlu0 0
    %173 = vperm.xlu0 %172, %v75
    %v174 = vpop.permute.xlu0 %173
    %177 = vset.pattern.permute.xlu0 0
    %178 = vperm.xlu0 %177, %v76
    %v179 = vpop.permute.xlu0 %178
    %182 = vset.pattern.permute.xlu0 0
    %183 = vperm.xlu0 %182, %v77
    %v184 = vpop.permute.xlu0 %183
    %187 = vset.pattern.permute.xlu0 0
    %188 = vperm.xlu0 %187, %v78
    %v189 = vpop.permute.xlu0 %188
    %192 = vset.pattern.permute.xlu0 0
    %193 = vperm.xlu0 %192, %v79
    %v194 = vpop.permute.xlu0 %193
    %197 = vset.pattern.permute.xlu0 0
    %198 = vperm.xlu0 %197, %v80
    %v199 = vpop.permute.xlu0 %198
    %202 = vset.pattern.permute.xlu0 0
    %203 = vperm.xlu0 %202, %v81
    %v204 = vpop.permute.xlu0 %203
    %207 = vset.pattern.permute.xlu0 0
    %208 = vperm.xlu0 %207, %v82
    %v209 = vpop.permute.xlu0 %208
    %212 = vset.pattern.permute.xlu0 0
    %213 = vperm.xlu0 %212, %v83
    %v214 = vpop.permute.xlu0 %213
    %217 = vset.pattern.permute.xlu0 0
    %218 = vperm.xlu0 %217, %v84
    %v219 = vpop.permute.xlu0 %218
    %222 = vset.pattern.permute.xlu0 0
    %223 = vperm.xlu0 %222, %v85
    %v224 = vpop.permute.xlu0 %223
    %227 = vset.pattern.permute.xlu0 0
    %228 = vperm.xlu0 %227, %v86
    %v229 = vpop.permute.xlu0 %228
    %232 = vset.pattern.permute.xlu0 0
    %233 = vperm.xlu0 %232, %v87
    %v234 = vpop.permute.xlu0 %233
    %237 = vset.pattern.permute.xlu0 0
    %238 = vperm.xlu0 %237, %v88
    %v239 = vpop.permute.xlu0 %238
    %242 = vset.pattern.permute.xlu0 0
    %243 = vperm.xlu0 %242, %v89
    %v244 = vpop.permute.xlu0 %243
    %247 = vset.pattern.permute.xlu0 0
    %248 = vperm.xlu0 %247, %v90
    %v249 = vpop.permute.xlu0 %248
    %252 = vset.pattern.permute.xlu0 0
    %253 = vperm.xlu0 %252, %v91
    %v254 = vpop.permute.xlu0 %253
    %257 = vset.pattern.permute.xlu0 0
    %258 = vperm.xlu0 %257, %v92
    %v259 = vpop.permute.xlu0 %258
    %262 = vset.pattern.permute.xlu0 0
    %263 = vperm.xlu0 %262, %v93
    %v264 = vpop.permute.xlu0 %263
    %267 = vset.pattern.permute.xlu0 0
    %268 = vperm.xlu0 %267, %v94
    %v269 = vpop.permute.xlu0 %268
    %272 = vset.pattern.permute.xlu0 0
    %273 = vperm.xlu0 %272, %v95
    %v274 = vpop.permute.xlu0 %273
    %277 = vset.pattern.permute.xlu0 0
    %278 = vperm.xlu0 %277, %v96
    %v279 = vpop.permute.xlu0 %278
    %282 = vset.pattern.permute.xlu0 0
    %283 = vperm.xlu0 %282, %v97
    %v284 = vpop.permute.xlu0 %283
    %287 = vset.pattern.permute.xlu0 0
    %288 = vperm.xlu0 %287, %v98
    %v289 = vpop.permute.xlu0 %288
    %292 = vset.pattern.permute.xlu0 0
    %293 = vperm.xlu0 %292, %v99
    %v294 = vpop.permute.xlu0 %293
    %297 = vset.pattern.permute.xlu0 0
    %298 = vperm.xlu0 %297, %v100
    %v299 = vpop.permute.xlu0 %298
    %302 = vset.pattern.permute.xlu0 0
    %303 = vperm.xlu0 %302, %v101
    %v304 = vpop.permute.xlu0 %303
    %307 = vset.pattern.permute.xlu0 0
    %308 = vperm.xlu0 %307, %v102
    %v309 = vpop.permute.xlu0 %308
    %312 = vset.pattern.permute.xlu0 0
    %313 = vperm.xlu0 %312, %v103
    %v314 = vpop.permute.xlu0 %313
    %317 = vset.pattern.permute.xlu0 0
    %318 = vperm.xlu0 %317, %v104
    %v319 = vpop.permute.xlu0 %318
    %322 = vset.pattern.permute.xlu0 0
    %323 = vperm.xlu0 %322, %v105
    %v324 = vpop.permute.xlu0 %323
    %327 = vset.pattern.permute.xlu0 0
    %328 = vperm.xlu0 %327, %v106
    %v329 = vpop.permute.xlu0 %328
    %332 = vset.pattern.permute.xlu0 0
    %333 = vperm.xlu0 %332, %v107
    %v334 = vpop.permute.xlu0 %333
    %337 = vset.pattern.permute.xlu0 0
    %338 = vperm.xlu0 %337, %v108
    %v339 = vpop.permute.xlu0 %338
    %342 = vset.pattern.permute.xlu0 0
    %343 = vperm.xlu0 %342, %v109
    %v344 = vpop.permute.xlu0 %343
    %347 = vset.pattern.permute.xlu0 0
    %348 = vperm.xlu0 %347, %v110
    %v349 = vpop.permute.xlu0 %348
    %v351 = vmul.f32 %v15, %v114
    %v352 = vmul.f32 %v16, %v119
    %v353 = vmul.f32 %v17, %v124
    %v354 = vmul.f32 %v18, %v129
    %v355 = vmul.f32 %v19, %v134
    %v356 = vmul.f32 %v20, %v139
    %v357 = vmul.f32 %v21, %v144
    %v358 = vmul.f32 %v22, %v149
    %v359 = vmul.f32 %v23, %v154
    %v360 = vmul.f32 %v24, %v159
    %v361 = vmul.f32 %v25, %v164
    %v362 = vmul.f32 %v26, %v169
    %v363 = vmul.f32 %v27, %v174
    %v364 = vmul.f32 %v28, %v179
    %v365 = vmul.f32 %v29, %v184
    %v366 = vmul.f32 %v30, %v189
    %v367 = vmul.f32 %v31, %v194
    %v368 = vmul.f32 %v32, %v199
    %v369 = vmul.f32 %v33, %v204
    %v370 = vmul.f32 %v34, %v209
    %v371 = vmul.f32 %v35, %v214
    %v372 = vmul.f32 %v36, %v219
    %v373 = vmul.f32 %v37, %v224
    %v374 = vmul.f32 %v38, %v229
    %v375 = vmul.f32 %v39, %v234
    %v376 = vmul.f32 %v40, %v239
    %v377 = vmul.f32 %v41, %v244
    %v378 = vmul.f32 %v42, %v249
    %v379 = vmul.f32 %v43, %v254
    %v380 = vmul.f32 %v44, %v259
    %v381 = vmul.f32 %v45, %v264
    %v382 = vmul.f32 %v46, %v269
    %v383 = vmul.f32 %v47, %v274
    %v384 = vmul.f32 %v48, %v279
    %v385 = vmul.f32 %v49, %v284
    %v386 = vmul.f32 %v50, %v289
    %v387 = vmul.f32 %v51, %v294
    %v388 = vmul.f32 %v52, %v299
    %v389 = vmul.f32 %v53, %v304
    %v390 = vmul.f32 %v54, %v309
    %v391 = vmul.f32 %v55, %v314
    %v392 = vmul.f32 %v56, %v319
    %v393 = vmul.f32 %v57, %v324
    %v394 = vmul.f32 %v58, %v329
    %v395 = vmul.f32 %v59, %v334
    %v396 = vmul.f32 %v60, %v339
    %v397 = vmul.f32 %v61, %v344
    %v398 = vmul.f32 %v62, %v349
    %vm399 = vcmask 517120
    %v400 = vsel %vm399, %v351, 0.0
    %v401 = vsel %vm399, %v352, 0.0
    %v402 = vadd.f32 %v400, %v401
    %v403 = vsel %vm399, %v353, 0.0
    %v404 = vadd.f32 %v402, %v403
    %v405 = vsel %vm399, %v354, 0.0
    %v406 = vadd.f32 %v404, %v405
    %v407 = vsel %vm399, %v355, 0.0
    %v408 = vadd.f32 %v406, %v407
    %v409 = vsel %vm399, %v356, 0.0
    %v410 = vadd.f32 %v408, %v409
    %v411 = vsel %vm399, %v357, 0.0
    %v412 = vadd.f32 %v410, %v411
    %v413 = vsel %vm399, %v358, 0.0
    %v414 = vadd.f32 %v412, %v413
    %v415 = vsel %vm399, %v359, 0.0
    %v416 = vadd.f32 %v414, %v415
    %v417 = vsel %vm399, %v360, 0.0
    %v418 = vadd.f32 %v416, %v417
    %v419 = vsel %vm399, %v361, 0.0
    %v420 = vadd.f32 %v418, %v419
    %v421 = vsel %vm399, %v362, 0.0
    %v422 = vadd.f32 %v420, %v421
    %v423 = vsel %vm399, %v363, 0.0
    %v424 = vadd.f32 %v422, %v423
    %v425 = vsel %vm399, %v364, 0.0
    %v426 = vadd.f32 %v424, %v425
    %v427 = vsel %vm399, %v365, 0.0
    %v428 = vadd.f32 %v426, %v427
    %v429 = vsel %vm399, %v366, 0.0
    %v430 = vadd.f32 %v428, %v429
    %v431 = vsel %vm399, %v367, 0.0
    %v432 = vadd.f32 %v430, %v431
    %v433 = vsel %vm399, %v368, 0.0
    %v434 = vadd.f32 %v432, %v433
    %v435 = vsel %vm399, %v369, 0.0
    %v436 = vadd.f32 %v434, %v435
    %v437 = vsel %vm399, %v370, 0.0
    %v438 = vadd.f32 %v436, %v437
    %v439 = vsel %vm399, %v371, 0.0
    %v440 = vadd.f32 %v438, %v439
    %v441 = vsel %vm399, %v372, 0.0
    %v442 = vadd.f32 %v440, %v441
    %v443 = vsel %vm399, %v373, 0.0
    %v444 = vadd.f32 %v442, %v443
    %v445 = vsel %vm399, %v374, 0.0
    %v446 = vadd.f32 %v444, %v445
    %v447 = vsel %vm399, %v375, 0.0
    %v448 = vadd.f32 %v446, %v447
    %v449 = vsel %vm399, %v376, 0.0
    %v450 = vadd.f32 %v448, %v449
    %v451 = vsel %vm399, %v377, 0.0
    %v452 = vadd.f32 %v450, %v451
    %v453 = vsel %vm399, %v378, 0.0
    %v454 = vadd.f32 %v452, %v453
    %v455 = vsel %vm399, %v379, 0.0
    %v456 = vadd.f32 %v454, %v455
    %v457 = vsel %vm399, %v380, 0.0
    %v458 = vadd.f32 %v456, %v457
    %v459 = vsel %vm399, %v381, 0.0
    %v460 = vadd.f32 %v458, %v459
    %v461 = vsel %vm399, %v382, 0.0
    %v462 = vadd.f32 %v460, %v461
    %v463 = vsel %vm399, %v383, 0.0
    %v464 = vadd.f32 %v462, %v463
    %v465 = vsel %vm399, %v384, 0.0
    %v466 = vadd.f32 %v464, %v465
    %v467 = vsel %vm399, %v385, 0.0
    %v468 = vadd.f32 %v466, %v467
    %v469 = vsel %vm399, %v386, 0.0
    %v470 = vadd.f32 %v468, %v469
    %v471 = vsel %vm399, %v387, 0.0
    %v472 = vadd.f32 %v470, %v471
    %v473 = vsel %vm399, %v388, 0.0
    %v474 = vadd.f32 %v472, %v473
    %v475 = vsel %vm399, %v389, 0.0
    %v476 = vadd.f32 %v474, %v475
    %v477 = vsel %vm399, %v390, 0.0
    %v478 = vadd.f32 %v476, %v477
    %v479 = vsel %vm399, %v391, 0.0
    %v480 = vadd.f32 %v478, %v479
    %v481 = vsel %vm399, %v392, 0.0
    %v482 = vadd.f32 %v480, %v481
    %v483 = vsel %vm399, %v393, 0.0
    %v484 = vadd.f32 %v482, %v483
    %v485 = vsel %vm399, %v394, 0.0
    %v486 = vadd.f32 %v484, %v485
    %v487 = vsel %vm399, %v395, 0.0
    %v488 = vadd.f32 %v486, %v487
    %v489 = vsel %vm399, %v396, 0.0
    %v490 = vadd.f32 %v488, %v489
    %v491 = vsel %vm399, %v397, 0.0
    %v492 = vadd.f32 %v490, %v491
    %v493 = vsel %vm399, %v398, 0.0
    %v494 = vadd.f32 %v492, %v493
    %v495 = vld [vmem:[%s2] sm:$0x1]
    %v497 = vperm.slane %v495, 0
    %v499 = vadd.f32 %v494, %v497
    %500 = vst.msk [vmem:[#allocation2] sm:$0x3] %vm399, %v499
    // Predicated region
    $region14: #{_pos_embedding_forward.1} parent=1 // pred_check
      _
    $region15: #{_pos_embedding_forward.1} parent=1 // pred_check_branch
      %502 = sbr.rel (0) target = $region17
    $region16: #{_pos_embedding_forward.1} parent=1 // pred_region
      %504 = vsyncadd [#allocation3], 0
      %s506 = sshll.u32 [#allocation2], 4
      %s507 = int_to_ptr.vmem [resolvable:$true] %s506
      %s508 = sshll.u32 %s3, 4
      %s509 = int_to_ptr.hbm [resolvable:$true] %s508
      %511 = dma.vmem_to_hbm [thread:$0]  %s507, 32, %s509, [#allocation3]
    $region17: #{_pos_embedding_forward.1} parent=1 // pred_fallthru
      _
    // Predicated region
    $region18: #{_pos_embedding_forward.1} parent=1 // pred_check
      _
    $region19: #{_pos_embedding_forward.1} parent=1 // pred_check_branch
      %513 = sbr.rel (0) target = $region21
    $region20: #{_pos_embedding_forward.1} parent=1 // pred_region
      %515 = dma.done [#allocation3], 32
    $region21: #{_pos_embedding_forward.1} parent=1 // pred_fallthru
      _
    %516 = vsyncpa [#allocation3], 1

</llo_original>
